<compile_context>
chip_gen: v7x
topology: tpu7x:2x2x1
jax: 0.10.0
libtpu: 0.0.40
codegen_flags: <defaults>
</compile_context>

<pallas_src>
import functools

import jax
import jax.numpy as jnp
from jax import lax
from jax.experimental import pallas as pl
from jax.experimental.pallas import tpu as pltpu

UNITS = 11
FACTOR = -1.0      # RecurrentAdditiveCell(units=11, factor=-1)

_MAX_TT_FINAL = 2048   # time-chunk (multiple of 8) for the reduce-only path
_MAX_TT_SEQ = 512      # time-chunk (multiple of 8) for the sequence path
_MAX_BB = 8            # batch rows per block


def _mask_tail(x, c, T, TT):
    """Zero out timesteps past the end of the sequence in a partial tail chunk."""
    valid = T - c * TT                      # > TT for all but the last chunk
    t_idx = lax.broadcasted_iota(jnp.int32, x.shape, 1)
    return jnp.where(t_idx < valid, x, jnp.float32(0.0))


def _final_kernel(x_ref, sum_ref, *, T, TT, need_mask):
    """return_sequences=False path.

    x_ref  : (BB, TT, D)  one time-chunk for BB batch rows
    sum_ref: (BB, D)      resident output block accumulating sum_t x[b, t, :]
    """
    c = pl.program_id(1)

    @pl.when(c == 0)
    def _():
        sum_ref[...] = jnp.zeros_like(sum_ref)

    x = x_ref[...]
    if need_mask:
        x = _mask_tail(x, c, T, TT)
    sum_ref[...] = sum_ref[...] + jnp.sum(x, axis=1)


def _seq_kernel(init_ref, x_ref, seq_ref, carry_ref, *, T, TT, BB, D, need_mask):
    """return_sequences=True path.

    init_ref : (BB, 1, D)   initial counter (block index constant along chunks)
    x_ref    : (BB, TT, D)  one time-chunk
    seq_ref  : (BB, TT, D)  per-step counters for this chunk (single whole-chunk store)
    carry_ref: (BB, 1, D)   VMEM scratch carrying the counter across chunks
    """
    c = pl.program_id(1)

    @pl.when(c == 0)
    def _():
        carry_ref[...] = init_ref[...]

    x = x_ref[...]
    if need_mask:
        x = _mask_tail(x, c, T, TT)

    # Vectorized inclusive prefix sum along time: Hillis-Steele scan,
    # ceil(log2(TT)) whole-tile shift+add passes (no serial per-timestep loop).
    s = x
    shift = 1
    while shift < TT:
        shifted = jnp.concatenate(
            [jnp.zeros((BB, shift, D), jnp.float32), s[:, :TT - shift, :]], axis=1)
        s = s + shifted
        shift *= 2

    out = carry_ref[...] + jnp.float32(FACTOR) * s   # (BB,1,D) broadcast + (BB,TT,D)
    seq_ref[...] = out
    # Tail rows (if any) were zero-masked, so the last row holds the last valid counter.
    carry_ref[...] = out[:, TT - 1:TT, :]


def my_rnn_forward(x, initial_state=None, return_sequences=False, return_state=False,
                   max_chunk=None):
    """x: (B, T, D) float32 (PyTorch convention). Returns the same objects as myRNN.forward."""
    x = jnp.asarray(x, jnp.float32)
    B, T, D = x.shape

    # Accept (B, 1) (PyTorch default) or (B, D) initial states.
    if initial_state is None:
        init = jnp.zeros((B, D), jnp.float32)
    else:
        init = jnp.asarray(initial_state, jnp.float32)
        if init.ndim == 1:
            init = init[:, None]
        init = jnp.broadcast_to(init, (B, D))

    # Empty-sequence guard: counter never updates.
    if T == 0:
        final = init
        y = jnp.zeros((B, 0, D), jnp.float32)
        out = y if return_sequences else final
        return [out, final] if return_state else out

    # Block geometry.
    BB = B if B <= _MAX_BB else _MAX_BB
    max_tt = max_chunk if max_chunk is not None else (
        _MAX_TT_SEQ if return_sequences else _MAX_TT_FINAL)
    TT = T if T <= max_tt else max_tt              # TT == T, or a multiple of 8
    n_b = pl.cdiv(B, BB)
    n_chunks = pl.cdiv(T, TT)
    need_mask = (T % TT) != 0                      # partial tail chunk -> mask in-kernel

    grid = (n_b, n_chunks)
    x_spec = pl.BlockSpec((BB, TT, D), lambda b, c: (b, c, 0))
    cparams = pltpu.CompilerParams(
        dimension_semantics=("parallel", "arbitrary"),   # B independent; T is a recurrence
        vmem_limit_bytes=48 * 1024 * 1024,
    )

    if return_sequences:
        init3 = init.reshape(B, 1, D)
        kernel = functools.partial(_seq_kernel, T=T, TT=TT, BB=BB, D=D,
                                   need_mask=need_mask)
        y = pl.pallas_call(
            kernel,
            out_shape=jax.ShapeDtypeStruct((B, T, D), jnp.float32),
            grid_spec=pltpu.PrefetchScalarGridSpec(
                num_scalar_prefetch=0,
                grid=grid,
                in_specs=[pl.BlockSpec((BB, 1, D), lambda b, c: (b, 0, 0)),
                          x_spec],
                out_specs=pl.BlockSpec((BB, TT, D), lambda b, c: (b, c, 0)),
                scratch_shapes=[pltpu.VMEM((BB, 1, D), jnp.float32)],
            ),
            compiler_params=cparams,
        )(init3, x)
        final = y[:, T - 1, :]                     # state[0] == last step_counter
        out = y
    else:
        kernel = functools.partial(_final_kernel, T=T, TT=TT, need_mask=need_mask)
        sums = pl.pallas_call(
            kernel,
            out_shape=jax.ShapeDtypeStruct((B, D), jnp.float32),
            grid_spec=pltpu.PrefetchScalarGridSpec(
                num_scalar_prefetch=0,
                grid=grid,
                in_specs=[x_spec],
                out_specs=pl.BlockSpec((BB, D), lambda b, c: (b, 0)),
            ),
            compiler_params=cparams,
        )(x)
        final = init + jnp.float32(FACTOR) * sums   # tiny (B, D) epilogue in the wrapper
        out = final

    if return_state:
        return [out, final]
    return out


if __name__ == "__main__":
    # Small shapes consistent with the module: batch=2, seq=8, units=11.
    key = jax.random.PRNGKey(0)
    B, T, D = 2, 8, UNITS
    x = jax.random.normal(key, (B, T, D), dtype=jnp.float32)

    # Default config: return_sequences=False, return_state=False -> final counter (B, D)
    out = jax.block_until_ready(my_rnn_forward(x))
    ref_final = FACTOR * jnp.sum(x, axis=1)
    assert out.shape == (B, D) and out.dtype == jnp.float32
    assert jnp.allclose(out, ref_final, atol=1e-5, rtol=1e-5)

    # return_sequences / return_state paths.
    y_seq, state = my_rnn_forward(x, return_sequences=True, return_state=True)
    y_seq = jax.block_until_ready(y_seq)
    ref_seq = FACTOR * jnp.cumsum(x, axis=1)
    assert y_seq.shape == (B, T, D)
    assert jnp.allclose(y_seq, ref_seq, atol=1e-5, rtol=1e-5)
    assert jnp.allclose(state, ref_final, atol=1e-5, rtol=1e-5)

    # Non-default initial_state of PyTorch shape (B, 1).
    init = jnp.full((B, 1), 3.0, jnp.float32)
    out2 = jax.block_until_ready(my_rnn_forward(x, initial_state=init))
    assert jnp.allclose(out2, 3.0 + ref_final, atol=1e-5, rtol=1e-5)

    # Multi-chunk + in-kernel tail-masking path (chunk=8 over T=20 -> partial last chunk).
    B2, T2 = 2, 20
    x2 = jax.random.normal(jax.random.PRNGKey(1), (B2, T2, D), dtype=jnp.float32)
    outf = jax.block_until_ready(my_rnn_forward(x2, max_chunk=8))
    assert jnp.allclose(outf, FACTOR * jnp.sum(x2, axis=1), atol=1e-5, rtol=1e-5)
    ys2 = jax.block_until_ready(my_rnn_forward(x2, return_sequences=True, max_chunk=8))
    assert jnp.allclose(ys2, FACTOR * jnp.cumsum(x2, axis=1), atol=1e-5, rtol=1e-5)

    print("KERNEL_OK")
</pallas_src>

<mosaic_0001>
module attributes {stable_mosaic.version = 11 : i64} {
  func.func @_final_kernel(%arg0: i32, %arg1: i32, %arg2: memref<2x8x11xf32, #tpu.memory_space<vmem>>, %arg3: memref<2x11xf32, #tpu.memory_space<vmem>>) attributes {dimension_semantics = [#tpu.dimension_semantics<parallel>, #tpu.dimension_semantics<arbitrary>], iteration_bounds = array<i64: 1, 1>, scalar_prefetch = 0 : i64, scratch_operands = 0 : i64, tpu.core_type = #tpu.core_type<tc>, window_params = [{transform_indices = @transform_0, window_bounds = array<i64: 2, 8, 11>}, {transform_indices = @transform_1, window_bounds = array<i64: 2, 11>}]} {
    %c0_i32 = arith.constant 0 : i32
    %0 = arith.cmpi eq, %arg1, %c0_i32 : i32
    %1 = arith.extui %0 : i1 to i32
    %c0_i32_0 = arith.constant 0 : i32
    %2 = arith.cmpi ne, %1, %c0_i32_0 : i32
    scf.if %2 {
      %cst_7 = arith.constant 0.000000e+00 : f32
      %8 = vector.broadcast %cst_7 : f32 to vector<2x11xf32>
      %c0_8 = arith.constant 0 : index
      %c0_9 = arith.constant 0 : index
      %9 = vector.load %arg3[%c0_8, %c0_9] : memref<2x11xf32, #tpu.memory_space<vmem>>, vector<2x11xf32>
      tpu.vector_store %arg3[%c0_8, %c0_9], %8 {strides = array<i32>} : memref<2x11xf32, #tpu.memory_space<vmem>>, vector<2x11xf32>,
    } else {
    }
    %c0 = arith.constant 0 : index
    %c0_1 = arith.constant 0 : index
    %c0_2 = arith.constant 0 : index
    %3 = vector.load %arg2[%c0, %c0_1, %c0_2] : memref<2x8x11xf32, #tpu.memory_space<vmem>>, vector<2x8x11xf32>
    %c0_3 = arith.constant 0 : index
    %c0_4 = arith.constant 0 : index
    %4 = vector.load %arg3[%c0_3, %c0_4] : memref<2x11xf32, #tpu.memory_space<vmem>>, vector<2x11xf32>
    %cst = arith.constant dense<0.000000e+00> : vector<2x11xf32>
    %5 = vector.multi_reduction <add>, %3, %cst [1] : vector<2x8x11xf32> to vector<2x11xf32>
    %6 = arith.addf %4, %5 : vector<2x11xf32>
    %c0_5 = arith.constant 0 : index
    %c0_6 = arith.constant 0 : index
    %7 = vector.load %arg3[%c0_5, %c0_6] : memref<2x11xf32, #tpu.memory_space<vmem>>, vector<2x11xf32>
    tpu.vector_store %arg3[%c0_5, %c0_6], %6 {strides = array<i32>} : memref<2x11xf32, #tpu.memory_space<vmem>>, vector<2x11xf32>,
    return
  }
  func.func @transform_0(%arg0: i32, %arg1: i32) -> (i32, i32, i32) {
    %c0_i32 = arith.constant 0 : i32
    %c0_i32_0 = arith.constant 0 : i32
    return %arg0, %arg1, %c0_i32 : i32, i32, i32
  }
  func.func @transform_1(%arg0: i32, %arg1: i32) -> (i32, i32) {
    %c0_i32 = arith.constant 0 : i32
    %c0_i32_0 = arith.constant 0 : i32
    return %arg0, %c0_i32 : i32, i32
  }
}

</mosaic_0001>

<llo_original>
// kernel: tpu_custom_call.1
$region0: #{tpu_custom_call.1}
  #allocation0 [shape = 'u32[]', space=smem, size = 0x4, offset = 0x4, fixed_abs, tag = 'smem constant byte address 0x4 - core index']
  #allocation1 [shape = 'u32[144,128]{1,0:T(1,128)}', space=vmem, size = 0x12000, scoped, tag = 'internal scratch']
  %s0 = inlined_call_operand.hbm [shape: f32[2,8,11], index: 0, kind: input, shape index: {}]
  %s1 = inlined_call_operand.hbm [shape: f32[2,11], index: 1, kind: output, shape index: {}]
  %s2 = sld [smem:[#allocation0]]
  $region22: #{tpu_custom_call.1} parent=0
    _
  %s4 = ssub.s32 1, %s2
  %s5 = scalar_select 0, %s4, %s2
  $region1: #{tpu_custom_call.1} parent=0
    #allocation2 [shape = 'u8[8192]{0}', space=vmem, size = 0x2000, scoped, tag = 'input window, operand 0, single buffered']
    #allocation3 [shape = 's32[1]{0}', space=sflag, size = 0x4, scoped, tag = 'scoped memory for tpu_custom_call.1']
    #allocation4 [shape = 's32[1]{0}', space=sflag, size = 0x4, scoped, tag = 'scoped memory for tpu_custom_call.1']
    #allocation5 [shape = 'u8[1024]{0}', space=vmem, size = 0x400, scoped, tag = 'output window, operand 0, single buffered']
    %6 = vsyncpa [#allocation3], 0
    %7 = vsyncpa [#allocation4], 0
    // Predicated region
    $region2: #{tpu_custom_call.1} parent=1 // pred_check
      _
    $region3: #{tpu_custom_call.1} parent=1 // pred_check_branch
      %9 = sbr.rel (0) target = $region5
    $region4: #{tpu_custom_call.1} parent=1 // pred_region
      %s11 = ssub.s32 256, 256
      %12 = vsyncadd [#allocation3], %s11
      %s13 = sshll.u32 [#allocation2], 4
      %s14 = int_to_ptr.vmem [resolvable:$true] %s13
      %19 = dma.hbm_to_vmem [thread:$0]  %s0, 256, %s14, [#allocation3], 128, 128, 8
    $region5: #{tpu_custom_call.1} parent=1 // pred_fallthru
      _
    // Predicated region
    $region6: #{tpu_custom_call.1} parent=1 // pred_check
      _
    $region7: #{tpu_custom_call.1} parent=1 // pred_check_branch
      %21 = sbr.rel (0) target = $region9
    $region8: #{tpu_custom_call.1} parent=1 // pred_region
      %22 = dma.done [#allocation3], 256
    $region9: #{tpu_custom_call.1} parent=1 // pred_fallthru
      _
    %p23 = scmp.eq.s32.totalorder 0, 0
    // Predicated region
    $region10: #{tpu_custom_call.1} parent=1 // pred_check
      %p24 = pneg %p23
    $region11: #{tpu_custom_call.1} parent=1 // pred_check_branch
      %26 = sbr.rel (%p24) target = $region13
    $region12: #{tpu_custom_call.1} parent=1 // pred_region
      %vm27 = vcmask 82944
      %28 = vst.msk [vmem:[#allocation5] sm:$0x3] %vm27, 0.0
    $region13: #{tpu_custom_call.1} parent=1 // pred_fallthru
      _
    %v29 = vld [vmem:[#allocation2] sm:$0xff]
    %v30 = vld [vmem:[#allocation2 + $0x8] sm:$0xff]
    %v31 = vld [vmem:[#allocation5] sm:$0x3]
    %vm32 = vcmask 89088
    %v33 = vsel %vm32, %v29, 0.0
    %v34 = vrot.slane %v33, 4
    %v35 = vadd.f32 %v33, %v34
    %v36 = vrot.slane %v35, 2
    %v37 = vadd.f32 %v35, %v36
    %v38 = vrot.slane %v37, 1
    %v39 = vadd.f32 %v37, %v38
    %v40 = vsel %vm32, %v30, 0.0
    %v41 = vrot.slane %v40, 4
    %v42 = vadd.f32 %v40, %v41
    %v43 = vrot.slane %v42, 2
    %v44 = vadd.f32 %v42, %v43
    %v45 = vrot.slane %v44, 1
    %v46 = vadd.f32 %v44, %v45
    %vm49 = vcmask 1041409
    %v50 = vsel %vm49, %v46, %v39
    %v52 = vadd.f32 %v31, %v50
    %vm53 = vcmask 82944
    %54 = vst.msk [vmem:[#allocation5] sm:$0x3] %vm53, %v52
    // Predicated region
    $region14: #{tpu_custom_call.1} parent=1 // pred_check
      _
    $region15: #{tpu_custom_call.1} parent=1 // pred_check_branch
      %56 = sbr.rel (0) target = $region17
    $region16: #{tpu_custom_call.1} parent=1 // pred_region
      %s58 = ssub.s32 32, 32
      %59 = vsyncadd [#allocation4], %s58
      %s61 = sshll.u32 [#allocation5], 4
      %s62 = int_to_ptr.vmem [resolvable:$true] %s61
      %64 = dma.vmem_to_hbm [thread:$0]  %s62, 32, %s1, [#allocation4]
    $region17: #{tpu_custom_call.1} parent=1 // pred_fallthru
      _
    // Predicated region
    $region18: #{tpu_custom_call.1} parent=1 // pred_check
      _
    $region19: #{tpu_custom_call.1} parent=1 // pred_check_branch
      %66 = sbr.rel (0) target = $region21
    $region20: #{tpu_custom_call.1} parent=1 // pred_region
      %67 = dma.done [#allocation4], 32
    $region21: #{tpu_custom_call.1} parent=1 // pred_fallthru
      _
    %68 = vsyncpa [#allocation3], 1
    %69 = vsyncpa [#allocation4], 1

</llo_original>
